<compile_context>
chip_gen: v5e
topology: v5e:2x2
jax: 0.10.0
libtpu: 0.0.40
codegen_flags: <defaults>
</compile_context>

<pallas_src>
from functools import partial

import jax
import jax.numpy as jnp
import numpy as np
from jax.experimental import pallas as pl
from jax.experimental.pallas import tpu as pltpu


# ---------------------------------------------------------------------------
# Helpers
# ---------------------------------------------------------------------------
def _shift_cols(x, s, n):
    """y[:, i] = x[:, i + s] for 0 <= i + s < n, else 0. (static shift s)"""
    rows = x.shape[0]
    if s == 0:
        return x
    if s > 0:
        return jnp.concatenate([x[:, s:], jnp.zeros((rows, s), x.dtype)], axis=1)
    return jnp.concatenate([jnp.zeros((rows, -s), x.dtype), x[:, :n + s]], axis=1)


def _conv_taps_mask(h, w):
    """(9, H*W) f32 validity mask for the 9 taps of a 3x3 / padding=1 conv."""
    hw = h * w
    hh, ww = np.meshgrid(np.arange(h), np.arange(w), indexing="ij")
    mask = np.zeros((9, hw), np.float32)
    for k in range(9):
        dh, dw = k // 3, k % 3
        valid = ((hh + dh - 1 >= 0) & (hh + dh - 1 < h) &
                 (ww + dw - 1 >= 0) & (ww + dw - 1 < w))
        mask[k] = valid.reshape(hw).astype(np.float32)
    return jnp.asarray(mask)


# ---------------------------------------------------------------------------
# Pallas kernel: fused concat-input double-conv + 1x1 output conv (one image)
# ---------------------------------------------------------------------------
def output_block_kernel(x1_ref, x2_ref, mask_ref, w1_ref, b1_ref, w2_ref,
                        b2_ref, w3_ref, b3_ref, o_ref, *, width, compute_dtype):
    # x1_ref, x2_ref: (C, H*W)      f32, one image (batch squeezed)
    # mask_ref:       (9, H*W)      f32 tap-validity mask (boundary handling)
    # w1_ref: (Cmid, 9*2C) bf16 ; w2_ref: (Cmid, 9*Cmid) bf16 ; w3_ref: (Cout, Cmid) bf16
    # b*_ref: (C, 1)  f32
    # o_ref:  (Cout, H*W)   lane-dense output
    hw = x1_ref.shape[-1]

    # implicit torch.cat([x2, x1], dim=1): x2 channels first (in VMEM only).
    xf = jnp.concatenate([x2_ref[...], x1_ref[...]], axis=0)      # (2C, H*W) f32

    def conv3x3(act, w_ref, b_ref):
        # act: (Cin, H*W) f32. Build the im2col slab (9*Cin, H*W) once and do a
        # single lane-dense MXU matmul: (Cmid, 9*Cin) x (9*Cin, H*W).
        slabs = []
        for k in range(9):
            dh, dw = k // 3, k % 3
            s = (dh - 1) * width + (dw - 1)       # flattened-spatial tap shift
            slabs.append(_shift_cols(act, s, hw) * mask_ref[k:k + 1, :])
        col = jnp.concatenate(slabs, axis=0).astype(compute_dtype)
        acc = jnp.dot(w_ref[...], col, preferred_element_type=jnp.float32)
        return jnp.maximum(acc + b_ref[...], 0.0)                 # f32 epilogue

    y1 = conv3x3(xf, w1_ref, b1_ref)                              # (Cmid, H*W) f32
    y2 = conv3x3(y1, w2_ref, b2_ref)                              # (Cmid, H*W) f32

    out = jnp.dot(w3_ref[...], y2.astype(compute_dtype),
                  preferred_element_type=jnp.float32) + b3_ref[...]
    o_ref[...] = out.astype(o_ref.dtype)                          # (Cout, H*W)


# ---------------------------------------------------------------------------
# Parameters (deterministic, PyTorch-style layout: OIHW weights + bias)
# ---------------------------------------------------------------------------
def init_params(key, in_channels, out_channels):
    cin2 = 2 * in_channels
    k1, k2, k3, k4, k5, k6 = jax.random.split(key, 6)

    def uinit(k, shape, fan_in):
        bound = float(np.sqrt(1.0 / fan_in))
        return jax.random.uniform(k, shape, jnp.float32, -bound, bound)

    return dict(
        w1=uinit(k1, (in_channels, cin2, 3, 3), cin2 * 9),
        b1=uinit(k2, (in_channels,), cin2 * 9),
        w2=uinit(k3, (in_channels, in_channels, 3, 3), in_channels * 9),
        b2=uinit(k4, (in_channels,), in_channels * 9),
        w3=uinit(k5, (out_channels, in_channels, 1, 1), in_channels),
        b3=uinit(k6, (out_channels,), in_channels),
    )


# ---------------------------------------------------------------------------
# Wrapper: free reshapes + one-time weight repack + pallas_call
# ---------------------------------------------------------------------------
def output_block_forward(params, x1, x2, *, compute_dtype=jnp.bfloat16):
    # x1, x2: (N, C, H, W) NCHW float32 (matching the PyTorch module signature)
    n, c, h, w = x1.shape
    assert x2.shape == x1.shape
    cin2 = 2 * c
    cmid = params["w1"].shape[0]
    cout = params["w3"].shape[0]
    hw = h * w

    # Metadata-only reshapes (no HBM pass): NCHW -> (N, C, H*W), spatial on lanes.
    x1f = x1.reshape(n, c, hw)
    x2f = x2.reshape(n, c, hw)

    # One-time weight repack to im2col-matmul form (weights are the LHS):
    #   (O, I, kh, kw) -> (O, 9*I), column index = (kh*3+kw)*I + i.
    w1k = jnp.transpose(params["w1"], (0, 2, 3, 1)).reshape(cmid, 9 * cin2).astype(compute_dtype)
    w2k = jnp.transpose(params["w2"], (0, 2, 3, 1)).reshape(cmid, 9 * cmid).astype(compute_dtype)
    w3k = params["w3"][:, :, 0, 0].astype(compute_dtype)            # (Cout, Cmid)
    b1k = params["b1"].reshape(cmid, 1)
    b2k = params["b2"].reshape(cmid, 1)
    b3k = params["b3"].reshape(cout, 1)
    mask = _conv_taps_mask(h, w)                                    # (9, H*W) f32

    kernel = partial(output_block_kernel, width=w, compute_dtype=compute_dtype)

    out_flat = pl.pallas_call(
        kernel,
        out_shape=jax.ShapeDtypeStruct((n, cout, hw), x1.dtype),
        grid_spec=pltpu.PrefetchScalarGridSpec(
            num_scalar_prefetch=0,
            grid=(n,),
            in_specs=[
                pl.BlockSpec((None, c, hw), lambda b: (b, 0, 0)),   # x1
                pl.BlockSpec((None, c, hw), lambda b: (b, 0, 0)),   # x2
                pl.BlockSpec((9, hw), lambda b: (0, 0)),            # tap mask
                pl.BlockSpec((cmid, 9 * cin2), lambda b: (0, 0)),   # w1
                pl.BlockSpec((cmid, 1), lambda b: (0, 0)),          # b1
                pl.BlockSpec((cmid, 9 * cmid), lambda b: (0, 0)),   # w2
                pl.BlockSpec((cmid, 1), lambda b: (0, 0)),          # b2
                pl.BlockSpec((cout, cmid), lambda b: (0, 0)),       # w3
                pl.BlockSpec((cout, 1), lambda b: (0, 0)),          # b3
            ],
            out_specs=pl.BlockSpec((None, cout, hw), lambda b: (b, 0, 0)),
        ),
        compiler_params=pltpu.CompilerParams(
            dimension_semantics=("parallel",),
            vmem_limit_bytes=32 * 1024 * 1024),
    )(x1f, x2f, mask, w1k, b1k, w2k, b2k, w3k, b3k)

    # Metadata-only reshape back to NCHW.
    return out_flat.reshape(n, cout, h, w)


# ---------------------------------------------------------------------------
# Pure-JAX reference (lax.conv, same bf16-operand / f32-accumulate quantization)
# ---------------------------------------------------------------------------
def output_block_reference(params, x1, x2, *, compute_dtype=jnp.bfloat16):
    dn = ("NCHW", "OIHW", "NCHW")

    def conv(x, w, pad):
        return jax.lax.conv_general_dilated(
            x.astype(compute_dtype), w.astype(compute_dtype), (1, 1), pad,
            dimension_numbers=dn, preferred_element_type=jnp.float32)

    x = jnp.concatenate([x2, x1], axis=1)
    y = jax.nn.relu(conv(x, params["w1"], ((1, 1), (1, 1)))
                    + params["b1"][None, :, None, None])
    y = jax.nn.relu(conv(y, params["w2"], ((1, 1), (1, 1)))
                    + params["b2"][None, :, None, None])
    y = conv(y, params["w3"], ((0, 0), (0, 0))) + params["b3"][None, :, None, None]
    return y


if __name__ == "__main__":
    key = jax.random.PRNGKey(0)
    kx1, kx2, kp = jax.random.split(key, 3)

    in_channels, out_channels = 4, 3
    n, h, w = 2, 16, 16

    x1 = jax.random.normal(kx1, (n, in_channels, h, w), jnp.float32)
    x2 = jax.random.normal(kx2, (n, in_channels, h, w), jnp.float32)
    params = init_params(kp, in_channels, out_channels)

    out = output_block_forward(params, x1, x2)
    jax.block_until_ready(out)
    assert out.shape == (n, out_channels, h, w)

    ref = output_block_reference(params, x1, x2)
    np.testing.assert_allclose(np.asarray(out), np.asarray(ref),
                               atol=2e-3, rtol=2e-3)

    print("KERNEL_OK")
</pallas_src>

<mosaic_0001>
module attributes {stable_mosaic.version = 11 : i64} {
  func.func @output_block_kernel(%arg0: i32, %arg1: memref<1x4x256xf32, #tpu.memory_space<vmem>>, %arg2: memref<1x4x256xf32, #tpu.memory_space<vmem>>, %arg3: memref<9x256xf32, #tpu.memory_space<vmem>>, %arg4: memref<4x72xbf16, #tpu.memory_space<vmem>>, %arg5: memref<4x1xf32, #tpu.memory_space<vmem>>, %arg6: memref<4x36xbf16, #tpu.memory_space<vmem>>, %arg7: memref<4x1xf32, #tpu.memory_space<vmem>>, %arg8: memref<3x4xbf16, #tpu.memory_space<vmem>>, %arg9: memref<3x1xf32, #tpu.memory_space<vmem>>, %arg10: memref<1x3x256xf32, #tpu.memory_space<vmem>>) attributes {dimension_semantics = [#tpu.dimension_semantics<parallel>], iteration_bounds = array<i64: 2>, scalar_prefetch = 0 : i64, scratch_operands = 0 : i64, tpu.core_type = #tpu.core_type<tc>, window_params = [{transform_indices = @transform_0, window_bounds = array<i64: 1, 4, 256>}, {transform_indices = @transform_1, window_bounds = array<i64: 1, 4, 256>}, {pipeline_mode = #tpu.pipeline_mode<synchronous>, transform_indices = @transform_2, window_bounds = array<i64: 9, 256>}, {pipeline_mode = #tpu.pipeline_mode<synchronous>, transform_indices = @transform_3, window_bounds = array<i64: 4, 72>}, {pipeline_mode = #tpu.pipeline_mode<synchronous>, transform_indices = @transform_4, window_bounds = array<i64: 4, 1>}, {pipeline_mode = #tpu.pipeline_mode<synchronous>, transform_indices = @transform_5, window_bounds = array<i64: 4, 36>}, {pipeline_mode = #tpu.pipeline_mode<synchronous>, transform_indices = @transform_6, window_bounds = array<i64: 4, 1>}, {pipeline_mode = #tpu.pipeline_mode<synchronous>, transform_indices = @transform_7, window_bounds = array<i64: 3, 4>}, {pipeline_mode = #tpu.pipeline_mode<synchronous>, transform_indices = @transform_8, window_bounds = array<i64: 3, 1>}, {transform_indices = @transform_9, window_bounds = array<i64: 1, 3, 256>}]} {
    %c0 = arith.constant 0 : index
    %c0_0 = arith.constant 0 : index
    %c0_1 = arith.constant 0 : index
    %0 = vector.load %arg2[%c0, %c0_0, %c0_1] : memref<1x4x256xf32, #tpu.memory_space<vmem>>, vector<1x4x256xf32>
    %1 = vector.shape_cast %0 : vector<1x4x256xf32> to vector<4x256xf32>
    %c0_2 = arith.constant 0 : index
    %c0_3 = arith.constant 0 : index
    %c0_4 = arith.constant 0 : index
    %2 = vector.load %arg1[%c0_2, %c0_3, %c0_4] : memref<1x4x256xf32, #tpu.memory_space<vmem>>, vector<1x4x256xf32>
    %3 = vector.shape_cast %2 : vector<1x4x256xf32> to vector<4x256xf32>
    %4 = tpu.concatenate %1, %3 in 0 : vector<4x256xf32>, vector<4x256xf32> -> vector<8x256xf32>
    %cst = arith.constant 0.000000e+00 : f32
    %5 = vector.broadcast %cst : f32 to vector<8x17xf32>
    %6 = vector.extract_strided_slice %4 {offsets = [0, 0], sizes = [8, 239], strides = [1, 1]} : vector<8x256xf32> to vector<8x239xf32>
    %7 = tpu.concatenate %5, %6 in 1 : vector<8x17xf32>, vector<8x239xf32> -> vector<8x256xf32>
    %c0_5 = arith.constant 0 : index
    %c0_6 = arith.constant 0 : index
    %8 = vector.load %arg3[%c0_5, %c0_6] : memref<9x256xf32, #tpu.memory_space<vmem>>, vector<1x256xf32>
    %9 = vector.broadcast %8 : vector<1x256xf32> to vector<8x256xf32>
    %10 = arith.mulf %7, %9 : vector<8x256xf32>
    %cst_7 = arith.constant 0.000000e+00 : f32
    %11 = vector.broadcast %cst_7 : f32 to vector<8x16xf32>
    %12 = vector.extract_strided_slice %4 {offsets = [0, 0], sizes = [8, 240], strides = [1, 1]} : vector<8x256xf32> to vector<8x240xf32>
    %13 = tpu.concatenate %11, %12 in 1 : vector<8x16xf32>, vector<8x240xf32> -> vector<8x256xf32>
    %c1 = arith.constant 1 : index
    %c0_8 = arith.constant 0 : index
    %14 = vector.load %arg3[%c1, %c0_8] : memref<9x256xf32, #tpu.memory_space<vmem>>, vector<1x256xf32>
    %15 = vector.broadcast %14 : vector<1x256xf32> to vector<8x256xf32>
    %16 = arith.mulf %13, %15 : vector<8x256xf32>
    %cst_9 = arith.constant 0.000000e+00 : f32
    %17 = vector.broadcast %cst_9 : f32 to vector<8x15xf32>
    %18 = vector.extract_strided_slice %4 {offsets = [0, 0], sizes = [8, 241], strides = [1, 1]} : vector<8x256xf32> to vector<8x241xf32>
    %19 = tpu.concatenate %17, %18 in 1 : vector<8x15xf32>, vector<8x241xf32> -> vector<8x256xf32>
    %c2 = arith.constant 2 : index
    %c0_10 = arith.constant 0 : index
    %20 = vector.load %arg3[%c2, %c0_10] : memref<9x256xf32, #tpu.memory_space<vmem>>, vector<1x256xf32>
    %21 = vector.broadcast %20 : vector<1x256xf32> to vector<8x256xf32>
    %22 = arith.mulf %19, %21 : vector<8x256xf32>
    %cst_11 = arith.constant 0.000000e+00 : f32
    %23 = vector.broadcast %cst_11 : f32 to vector<8x1xf32>
    %24 = vector.extract_strided_slice %4 {offsets = [0, 0], sizes = [8, 255], strides = [1, 1]} : vector<8x256xf32> to vector<8x255xf32>
    %25 = tpu.concatenate %23, %24 in 1 : vector<8x1xf32>, vector<8x255xf32> -> vector<8x256xf32>
    %c3 = arith.constant 3 : index
    %c0_12 = arith.constant 0 : index
    %26 = vector.load %arg3[%c3, %c0_12] : memref<9x256xf32, #tpu.memory_space<vmem>>, vector<1x256xf32>
    %27 = vector.broadcast %26 : vector<1x256xf32> to vector<8x256xf32>
    %28 = arith.mulf %25, %27 : vector<8x256xf32>
    %c4 = arith.constant 4 : index
    %c0_13 = arith.constant 0 : index
    %29 = vector.load %arg3[%c4, %c0_13] : memref<9x256xf32, #tpu.memory_space<vmem>>, vector<1x256xf32>
    %30 = vector.broadcast %29 : vector<1x256xf32> to vector<8x256xf32>
    %31 = arith.mulf %4, %30 : vector<8x256xf32>
    %32 = vector.extract_strided_slice %4 {offsets = [0, 1], sizes = [8, 255], strides = [1, 1]} : vector<8x256xf32> to vector<8x255xf32>
    %cst_14 = arith.constant 0.000000e+00 : f32
    %33 = vector.broadcast %cst_14 : f32 to vector<8x1xf32>
    %34 = tpu.concatenate %32, %33 in 1 : vector<8x255xf32>, vector<8x1xf32> -> vector<8x256xf32>
    %c5 = arith.constant 5 : index
    %c0_15 = arith.constant 0 : index
    %35 = vector.load %arg3[%c5, %c0_15] : memref<9x256xf32, #tpu.memory_space<vmem>>, vector<1x256xf32>
    %36 = vector.broadcast %35 : vector<1x256xf32> to vector<8x256xf32>
    %37 = arith.mulf %34, %36 : vector<8x256xf32>
    %38 = vector.extract_strided_slice %4 {offsets = [0, 15], sizes = [8, 241], strides = [1, 1]} : vector<8x256xf32> to vector<8x241xf32>
    %cst_16 = arith.constant 0.000000e+00 : f32
    %39 = vector.broadcast %cst_16 : f32 to vector<8x15xf32>
    %40 = tpu.concatenate %38, %39 in 1 : vector<8x241xf32>, vector<8x15xf32> -> vector<8x256xf32>
    %c6 = arith.constant 6 : index
    %c0_17 = arith.constant 0 : index
    %41 = vector.load %arg3[%c6, %c0_17] : memref<9x256xf32, #tpu.memory_space<vmem>>, vector<1x256xf32>
    %42 = vector.broadcast %41 : vector<1x256xf32> to vector<8x256xf32>
    %43 = arith.mulf %40, %42 : vector<8x256xf32>
    %44 = vector.extract_strided_slice %4 {offsets = [0, 16], sizes = [8, 240], strides = [1, 1]} : vector<8x256xf32> to vector<8x240xf32>
    %cst_18 = arith.constant 0.000000e+00 : f32
    %45 = vector.broadcast %cst_18 : f32 to vector<8x16xf32>
    %46 = tpu.concatenate %44, %45 in 1 : vector<8x240xf32>, vector<8x16xf32> -> vector<8x256xf32>
    %c7 = arith.constant 7 : index
    %c0_19 = arith.constant 0 : index
    %47 = vector.load %arg3[%c7, %c0_19] : memref<9x256xf32, #tpu.memory_space<vmem>>, vector<1x256xf32>
    %48 = vector.broadcast %47 : vector<1x256xf32> to vector<8x256xf32>
    %49 = arith.mulf %46, %48 : vector<8x256xf32>
    %50 = vector.extract_strided_slice %4 {offsets = [0, 17], sizes = [8, 239], strides = [1, 1]} : vector<8x256xf32> to vector<8x239xf32>
    %cst_20 = arith.constant 0.000000e+00 : f32
    %51 = vector.broadcast %cst_20 : f32 to vector<8x17xf32>
    %52 = tpu.concatenate %50, %51 in 1 : vector<8x239xf32>, vector<8x17xf32> -> vector<8x256xf32>
    %c8 = arith.constant 8 : index
    %c0_21 = arith.constant 0 : index
    %53 = vector.load %arg3[%c8, %c0_21] : memref<9x256xf32, #tpu.memory_space<vmem>>, vector<1x256xf32>
    %54 = vector.broadcast %53 : vector<1x256xf32> to vector<8x256xf32>
    %55 = arith.mulf %52, %54 : vector<8x256xf32>
    %56 = tpu.concatenate %10, %16, %22, %28, %31, %37, %43, %49, %55 in 0 : vector<8x256xf32>, vector<8x256xf32>, vector<8x256xf32>, vector<8x256xf32>, vector<8x256xf32>, vector<8x256xf32>, vector<8x256xf32>, vector<8x256xf32>, vector<8x256xf32> -> vector<72x256xf32>
    %57 = arith.truncf %56 : vector<72x256xf32> to vector<72x256xbf16>
    %c0_22 = arith.constant 0 : index
    %c0_23 = arith.constant 0 : index
    %58 = vector.load %arg4[%c0_22, %c0_23] : memref<4x72xbf16, #tpu.memory_space<vmem>>, vector<4x72xbf16>
    %cst_24 = arith.constant dense<0.000000e+00> : vector<4x256xf32>
    %59 = tpu.matmul %58, %57, %cst_24 {dimension_numbers = #tpu.dot_dimension_numbers<[1], [0], [0], [1], [0, 0, 1, 1], [], []>} : vector<4x72xbf16>, vector<72x256xbf16>, vector<4x256xf32> -> vector<4x256xf32>
    %c0_25 = arith.constant 0 : index
    %c0_26 = arith.constant 0 : index
    %60 = vector.load %arg5[%c0_25, %c0_26] : memref<4x1xf32, #tpu.memory_space<vmem>>, vector<4x1xf32>
    %61 = vector.broadcast %60 : vector<4x1xf32> to vector<4x256xf32>
    %62 = arith.addf %59, %61 : vector<4x256xf32>
    %cst_27 = arith.constant 0.000000e+00 : f32
    %63 = vector.broadcast %cst_27 : f32 to vector<4x256xf32>
    %64 = arith.maximumf %62, %63 : vector<4x256xf32>
    %cst_28 = arith.constant 0.000000e+00 : f32
    %65 = vector.broadcast %cst_28 : f32 to vector<4x17xf32>
    %66 = vector.extract_strided_slice %64 {offsets = [0, 0], sizes = [4, 239], strides = [1, 1]} : vector<4x256xf32> to vector<4x239xf32>
    %67 = tpu.concatenate %65, %66 in 1 : vector<4x17xf32>, vector<4x239xf32> -> vector<4x256xf32>
    %c0_29 = arith.constant 0 : index
    %c0_30 = arith.constant 0 : index
    %68 = vector.load %arg3[%c0_29, %c0_30] : memref<9x256xf32, #tpu.memory_space<vmem>>, vector<1x256xf32>
    %69 = vector.broadcast %68 : vector<1x256xf32> to vector<4x256xf32>
    %70 = arith.mulf %67, %69 : vector<4x256xf32>
    %cst_31 = arith.constant 0.000000e+00 : f32
    %71 = vector.broadcast %cst_31 : f32 to vector<4x16xf32>
    %72 = vector.extract_strided_slice %64 {offsets = [0, 0], sizes = [4, 240], strides = [1, 1]} : vector<4x256xf32> to vector<4x240xf32>
    %73 = tpu.concatenate %71, %72 in 1 : vector<4x16xf32>, vector<4x240xf32> -> vector<4x256xf32>
    %c1_32 = arith.constant 1 : index
    %c0_33 = arith.constant 0 : index
    %74 = vector.load %arg3[%c1_32, %c0_33] : memref<9x256xf32, #tpu.memory_space<vmem>>, vector<1x256xf32>
    %75 = vector.broadcast %74 : vector<1x256xf32> to vector<4x256xf32>
    %76 = arith.mulf %73, %75 : vector<4x256xf32>
    %cst_34 = arith.constant 0.000000e+00 : f32
    %77 = vector.broadcast %cst_34 : f32 to vector<4x15xf32>
    %78 = vector.extract_strided_slice %64 {offsets = [0, 0], sizes = [4, 241], strides = [1, 1]} : vector<4x256xf32> to vector<4x241xf32>
    %79 = tpu.concatenate %77, %78 in 1 : vector<4x15xf32>, vector<4x241xf32> -> vector<4x256xf32>
    %c2_35 = arith.constant 2 : index
    %c0_36 = arith.constant 0 : index
    %80 = vector.load %arg3[%c2_35, %c0_36] : memref<9x256xf32, #tpu.memory_space<vmem>>, vector<1x256xf32>
    %81 = vector.broadcast %80 : vector<1x256xf32> to vector<4x256xf32>
    %82 = arith.mulf %79, %81 : vector<4x256xf32>
    %cst_37 = arith.constant 0.000000e+00 : f32
    %83 = vector.broadcast %cst_37 : f32 to vector<4x1xf32>
    %84 = vector.extract_strided_slice %64 {offsets = [0, 0], sizes = [4, 255], strides = [1, 1]} : vector<4x256xf32> to vector<4x255xf32>
    %85 = tpu.concatenate %83, %84 in 1 : vector<4x1xf32>, vector<4x255xf32> -> vector<4x256xf32>
    %c3_38 = arith.constant 3 : index
    %c0_39 = arith.constant 0 : index
    %86 = vector.load %arg3[%c3_38, %c0_39] : memref<9x256xf32, #tpu.memory_space<vmem>>, vector<1x256xf32>
    %87 = vector.broadcast %86 : vector<1x256xf32> to vector<4x256xf32>
    %88 = arith.mulf %85, %87 : vector<4x256xf32>
    %c4_40 = arith.constant 4 : index
    %c0_41 = arith.constant 0 : index
    %89 = vector.load %arg3[%c4_40, %c0_41] : memref<9x256xf32, #tpu.memory_space<vmem>>, vector<1x256xf32>
    %90 = vector.broadcast %89 : vector<1x256xf32> to vector<4x256xf32>
    %91 = arith.mulf %64, %90 : vector<4x256xf32>
    %92 = vector.extract_strided_slice %64 {offsets = [0, 1], sizes = [4, 255], strides = [1, 1]} : vector<4x256xf32> to vector<4x255xf32>
    %cst_42 = arith.constant 0.000000e+00 : f32
    %93 = vector.broadcast %cst_42 : f32 to vector<4x1xf32>
    %94 = tpu.concatenate %92, %93 in 1 : vector<4x255xf32>, vector<4x1xf32> -> vector<4x256xf32>
    %c5_43 = arith.constant 5 : index
    %c0_44 = arith.constant 0 : index
    %95 = vector.load %arg3[%c5_43, %c0_44] : memref<9x256xf32, #tpu.memory_space<vmem>>, vector<1x256xf32>
    %96 = vector.broadcast %95 : vector<1x256xf32> to vector<4x256xf32>
    %97 = arith.mulf %94, %96 : vector<4x256xf32>
    %98 = vector.extract_strided_slice %64 {offsets = [0, 15], sizes = [4, 241], strides = [1, 1]} : vector<4x256xf32> to vector<4x241xf32>
    %cst_45 = arith.constant 0.000000e+00 : f32
    %99 = vector.broadcast %cst_45 : f32 to vector<4x15xf32>
    %100 = tpu.concatenate %98, %99 in 1 : vector<4x241xf32>, vector<4x15xf32> -> vector<4x256xf32>
    %c6_46 = arith.constant 6 : index
    %c0_47 = arith.constant 0 : index
    %101 = vector.load %arg3[%c6_46, %c0_47] : memref<9x256xf32, #tpu.memory_space<vmem>>, vector<1x256xf32>
    %102 = vector.broadcast %101 : vector<1x256xf32> to vector<4x256xf32>
    %103 = arith.mulf %100, %102 : vector<4x256xf32>
    %104 = vector.extract_strided_slice %64 {offsets = [0, 16], sizes = [4, 240], strides = [1, 1]} : vector<4x256xf32> to vector<4x240xf32>
    %cst_48 = arith.constant 0.000000e+00 : f32
    %105 = vector.broadcast %cst_48 : f32 to vector<4x16xf32>
    %106 = tpu.concatenate %104, %105 in 1 : vector<4x240xf32>, vector<4x16xf32> -> vector<4x256xf32>
    %c7_49 = arith.constant 7 : index
    %c0_50 = arith.constant 0 : index
    %107 = vector.load %arg3[%c7_49, %c0_50] : memref<9x256xf32, #tpu.memory_space<vmem>>, vector<1x256xf32>
    %108 = vector.broadcast %107 : vector<1x256xf32> to vector<4x256xf32>
    %109 = arith.mulf %106, %108 : vector<4x256xf32>
    %110 = vector.extract_strided_slice %64 {offsets = [0, 17], sizes = [4, 239], strides = [1, 1]} : vector<4x256xf32> to vector<4x239xf32>
    %cst_51 = arith.constant 0.000000e+00 : f32
    %111 = vector.broadcast %cst_51 : f32 to vector<4x17xf32>
    %112 = tpu.concatenate %110, %111 in 1 : vector<4x239xf32>, vector<4x17xf32> -> vector<4x256xf32>
    %c8_52 = arith.constant 8 : index
    %c0_53 = arith.constant 0 : index
    %113 = vector.load %arg3[%c8_52, %c0_53] : memref<9x256xf32, #tpu.memory_space<vmem>>, vector<1x256xf32>
    %114 = vector.broadcast %113 : vector<1x256xf32> to vector<4x256xf32>
    %115 = arith.mulf %112, %114 : vector<4x256xf32>
    %116 = tpu.concatenate %70, %76, %82, %88, %91, %97, %103, %109, %115 in 0 : vector<4x256xf32>, vector<4x256xf32>, vector<4x256xf32>, vector<4x256xf32>, vector<4x256xf32>, vector<4x256xf32>, vector<4x256xf32>, vector<4x256xf32>, vector<4x256xf32> -> vector<36x256xf32>
    %117 = arith.truncf %116 : vector<36x256xf32> to vector<36x256xbf16>
    %c0_54 = arith.constant 0 : index
    %c0_55 = arith.constant 0 : index
    %118 = vector.load %arg6[%c0_54, %c0_55] : memref<4x36xbf16, #tpu.memory_space<vmem>>, vector<4x36xbf16>
    %cst_56 = arith.constant dense<0.000000e+00> : vector<4x256xf32>
    %119 = tpu.matmul %118, %117, %cst_56 {dimension_numbers = #tpu.dot_dimension_numbers<[1], [0], [0], [1], [0, 0, 1, 1], [], []>} : vector<4x36xbf16>, vector<36x256xbf16>, vector<4x256xf32> -> vector<4x256xf32>
    %c0_57 = arith.constant 0 : index
    %c0_58 = arith.constant 0 : index
    %120 = vector.load %arg7[%c0_57, %c0_58] : memref<4x1xf32, #tpu.memory_space<vmem>>, vector<4x1xf32>
    %121 = vector.broadcast %120 : vector<4x1xf32> to vector<4x256xf32>
    %122 = arith.addf %119, %121 : vector<4x256xf32>
    %cst_59 = arith.constant 0.000000e+00 : f32
    %123 = vector.broadcast %cst_59 : f32 to vector<4x256xf32>
    %124 = arith.maximumf %122, %123 : vector<4x256xf32>
    %c0_60 = arith.constant 0 : index
    %c0_61 = arith.constant 0 : index
    %125 = vector.load %arg8[%c0_60, %c0_61] : memref<3x4xbf16, #tpu.memory_space<vmem>>, vector<3x4xbf16>
    %126 = arith.truncf %124 : vector<4x256xf32> to vector<4x256xbf16>
    %cst_62 = arith.constant dense<0.000000e+00> : vector<3x256xf32>
    %127 = tpu.matmul %125, %126, %cst_62 {dimension_numbers = #tpu.dot_dimension_numbers<[1], [0], [0], [1], [0, 0, 1, 1], [], []>} : vector<3x4xbf16>, vector<4x256xbf16>, vector<3x256xf32> -> vector<3x256xf32>
    %c0_63 = arith.constant 0 : index
    %c0_64 = arith.constant 0 : index
    %128 = vector.load %arg9[%c0_63, %c0_64] : memref<3x1xf32, #tpu.memory_space<vmem>>, vector<3x1xf32>
    %129 = vector.broadcast %128 : vector<3x1xf32> to vector<3x256xf32>
    %130 = arith.addf %127, %129 : vector<3x256xf32>
    %c0_65 = arith.constant 0 : index
    %c0_66 = arith.constant 0 : index
    %c0_67 = arith.constant 0 : index
    %131 = vector.load %arg10[%c0_65, %c0_66, %c0_67] : memref<1x3x256xf32, #tpu.memory_space<vmem>>, vector<1x3x256xf32>
    %132 = vector.shape_cast %131 : vector<1x3x256xf32> to vector<3x256xf32>
    %133 = vector.shape_cast %130 : vector<3x256xf32> to vector<1x3x256xf32>
    tpu.vector_store %arg10[%c0_65, %c0_66, %c0_67], %133 {strides = array<i32>} : memref<1x3x256xf32, #tpu.memory_space<vmem>>, vector<1x3x256xf32>,
    return
  }
  func.func @transform_0(%arg0: i32) -> (i32, i32, i32) {
    %c0_i32 = arith.constant 0 : i32
    %c0_i32_0 = arith.constant 0 : i32
    %c0_i32_1 = arith.constant 0 : i32
    return %arg0, %c0_i32, %c0_i32_0 : i32, i32, i32
  }
  func.func @transform_1(%arg0: i32) -> (i32, i32, i32) {
    %c0_i32 = arith.constant 0 : i32
    %c0_i32_0 = arith.constant 0 : i32
    %c0_i32_1 = arith.constant 0 : i32
    return %arg0, %c0_i32, %c0_i32_0 : i32, i32, i32
  }
  func.func @transform_2(%arg0: i32) -> (i32, i32) {
    %c0_i32 = arith.constant 0 : i32
    %c0_i32_0 = arith.constant 0 : i32
    %c0_i32_1 = arith.constant 0 : i32
    return %c0_i32, %c0_i32_0 : i32, i32
  }
  func.func @transform_3(%arg0: i32) -> (i32, i32) {
    %c0_i32 = arith.constant 0 : i32
    %c0_i32_0 = arith.constant 0 : i32
    %c0_i32_1 = arith.constant 0 : i32
    return %c0_i32, %c0_i32_0 : i32, i32
  }
  func.func @transform_4(%arg0: i32) -> (i32, i32) {
    %c0_i32 = arith.constant 0 : i32
    %c0_i32_0 = arith.constant 0 : i32
    %c0_i32_1 = arith.constant 0 : i32
    return %c0_i32, %c0_i32_0 : i32, i32
  }
  func.func @transform_5(%arg0: i32) -> (i32, i32) {
    %c0_i32 = arith.constant 0 : i32
    %c0_i32_0 = arith.constant 0 : i32
    %c0_i32_1 = arith.constant 0 : i32
    return %c0_i32, %c0_i32_0 : i32, i32
  }
  func.func @transform_6(%arg0: i32) -> (i32, i32) {
    %c0_i32 = arith.constant 0 : i32
    %c0_i32_0 = arith.constant 0 : i32
    %c0_i32_1 = arith.constant 0 : i32
    return %c0_i32, %c0_i32_0 : i32, i32
  }
  func.func @transform_7(%arg0: i32) -> (i32, i32) {
    %c0_i32 = arith.constant 0 : i32
    %c0_i32_0 = arith.constant 0 : i32
    %c0_i32_1 = arith.constant 0 : i32
    return %c0_i32, %c0_i32_0 : i32, i32
  }
  func.func @transform_8(%arg0: i32) -> (i32, i32) {
    %c0_i32 = arith.constant 0 : i32
    %c0_i32_0 = arith.constant 0 : i32
    %c0_i32_1 = arith.constant 0 : i32
    return %c0_i32, %c0_i32_0 : i32, i32
  }
  func.func @transform_9(%arg0: i32) -> (i32, i32, i32) {
    %c0_i32 = arith.constant 0 : i32
    %c0_i32_0 = arith.constant 0 : i32
    %c0_i32_1 = arith.constant 0 : i32
    return %arg0, %c0_i32, %c0_i32_0 : i32, i32, i32
  }
}

</mosaic_0001>

<llo_original>
// kernel: tpu_custom_call.1
$region0: #{tpu_custom_call.1}
  #allocation0 [shape = 'u32[]', space=smem, size = 0x4, offset = 0x4, fixed_abs, tag = 'smem constant byte address 0x4 - core index']
  #allocation1 [shape = 'u32[72,128]{1,0:T(1,128)}', space=vmem, size = 0x9000, scoped, tag = 'internal scratch']
  %s0 = inlined_call_operand.hbm [shape: f32[2,4,256], index: 0, kind: input, shape index: {}]
  %s1 = inlined_call_operand.hbm [shape: f32[2,4,256], index: 1, kind: input, shape index: {}]
  %s2 = inlined_call_operand.hbm [shape: f32[9,256], index: 2, kind: input, shape index: {}]
  %s3 = inlined_call_operand.vmem [shape: bf16[4,72], index: 3, kind: input, shape index: {}]
  %s4 = inlined_call_operand.vmem [shape: f32[4,1], index: 4, kind: input, shape index: {}]
  %s5 = inlined_call_operand.vmem [shape: bf16[4,36], index: 5, kind: input, shape index: {}]
  %s6 = inlined_call_operand.vmem [shape: f32[4,1], index: 6, kind: input, shape index: {}]
  %s7 = inlined_call_operand.vmem [shape: bf16[3,4], index: 7, kind: input, shape index: {}]
  %s8 = inlined_call_operand.vmem [shape: f32[3,1], index: 8, kind: input, shape index: {}]
  %s9 = inlined_call_operand.vmem [shape: f32[2,3,256], index: 9, kind: output, shape index: {}]
  %s10 = sld [smem:[#allocation0]]
  $region81: #{tpu_custom_call.1} parent=0
    _
  %s12 = ssub.s32 1, %s10
  %s13 = scalar_select 0, %s12, %s10
  $region1: #{tpu_custom_call.1} parent=0
    #allocation2 [shape = 'u8[8192]{0}', space=vmem, size = 0x2000, scoped, tag = 'input window, operand 0']
    #allocation3 [shape = 's32[2]{0}', space=sflag, size = 0x8, scoped, tag = 'scoped memory for tpu_custom_call.1']
    #allocation4 [shape = 'u8[8192]{0}', space=vmem, size = 0x2000, scoped, tag = 'input window, operand 1']
    #allocation5 [shape = 's32[2]{0}', space=sflag, size = 0x8, scoped, tag = 'scoped memory for tpu_custom_call.1']
    #allocation6 [shape = 'u8[16384]{0}', space=vmem, size = 0x4000, scoped, tag = 'input window, operand 2, single buffered']
    %14 = vsyncpa [#allocation3], 0
    %s15 = scalar_lea.sflag [#allocation3], 1
    %16 = vsyncpa %s15, 0
    %17 = vsyncpa [#allocation5], 0
    %s18 = scalar_lea.sflag [#allocation5], 1
    %19 = vsyncpa %s18, 0
    loop: start=0, step=1, limit=4
    $region2: #{tpu_custom_call.1} parent=1 // loop_pre_header
      _
    $region3: #{tpu_custom_call.1} parent=1 // loop_header
      %s21 = sphi 0, %s25
      %p22 = scmp.ge.s32.totalorder %s21, 4
      %s31 = sphi 0, %s33
      %s34 = sphi 0, %s31
      %s35 = sphi 0, %s34
      %s51 = sphi 0, %s35
      %s57 = sphi 0, %s59
      %s60 = sphi 0, %s57
      %s61 = sphi 0, %s60
      %s77 = sphi 0, %s61
      %s81 = sphi 0, %s81
      %s83 = sphi 0, %s81
      %s84 = sphi 0, %s83
      %s98 = sphi 0, %s84
      %s102 = sphi 0, %s102
      %s104 = sphi 0, %s102
      %s105 = sphi 0, %s104
      %s119 = sphi 0, %s105
      %s123 = sphi 0, %s123
      %s125 = sphi 0, %s123
      %s126 = sphi 0, %s125
      %s140 = sphi 0, %s126
      %s144 = sphi 0, %s144
      %s146 = sphi 0, %s144
      %s147 = sphi 0, %s146
      %s161 = sphi 0, %s147
      %s165 = sphi 0, %s165
      %s167 = sphi 0, %s165
      %s168 = sphi 0, %s167
      %s182 = sphi 0, %s168
      %s186 = sphi 0, %s186
      %s188 = sphi 0, %s186
      %s189 = sphi 0, %s188
      %s203 = sphi 0, %s189
      %s207 = sphi 0, %s207
      %s209 = sphi 0, %s207
      %s210 = sphi 0, %s209
      %s224 = sphi 0, %s210
      %s230 = sphi 0, %s232
      %s233 = sphi 0, %s230
      %s234 = sphi 0, %s233
      %s250 = sphi 0, %s234
    $region4: #{tpu_custom_call.1} parent=1 // loop_header_branch
      %24 = sbr.rel (%p22) target = $region8
    $region5: #{tpu_custom_call.1} parent=1 // loop_body
      %s26 = ssub.s32 %s21, 1
      %s27 = ssub.s32 %s21, 2
      %s28 = sadd.s32 %s21, 1
      %s29 = ssub.s32 %s21, %s28
      %p30 = scmp.eq.s32.totalorder %s29, 0
      %s32 = sadd.s32 %s31, 1
      %s33 = scalar_select %p30, %s31, %s32
      %p36 = pneg %p30
      %p37 = scmp.eq.s32.totalorder %s21, 1
      %p38 = por %p36, %p37
      %p39 = scmp.ne.s32.totalorder %s31, %s34
      %p40 = scmp.eq.s32.totalorder %s21, 0
      %p41 = por %p39, %p40
      %p42 = scmp.ne.s32.totalorder %s31, %s34
      %p43 = scmp.eq.s32.totalorder %s26, 1
      %p44 = por %p42, %p43
      %p45 = scmp.ne.s32.totalorder %s34, %s35
      %p46 = scmp.eq.s32.totalorder %s26, 0
      %p47 = por %p45, %p46
      %p48 = scmp.ne.s32.totalorder %s34, %s35
      %p49 = scmp.eq.s32.totalorder %s27, 1
      %p50 = por %p48, %p49
      %p52 = scmp.ne.s32.totalorder %s35, %s51
      %p53 = scmp.eq.s32.totalorder %s27, 0
      %p54 = por %p52, %p53
      %s55 = ssub.s32 %s21, %s28
      %p56 = scmp.eq.s32.totalorder %s55, 0
      %s58 = sadd.s32 %s57, 1
      %s59 = scalar_select %p56, %s57, %s58
      %p62 = pneg %p56
      %p63 = scmp.eq.s32.totalorder %s21, 1
      %p64 = por %p62, %p63
      %p65 = scmp.ne.s32.totalorder %s57, %s60
      %p66 = scmp.eq.s32.totalorder %s21, 0
      %p67 = por %p65, %p66
      %p68 = scmp.ne.s32.totalorder %s57, %s60
      %p69 = scmp.eq.s32.totalorder %s26, 1
      %p70 = por %p68, %p69
      %p71 = scmp.ne.s32.totalorder %s60, %s61
      %p72 = scmp.eq.s32.totalorder %s26, 0
      %p73 = por %p71, %p72
      %p74 = scmp.ne.s32.totalorder %s60, %s61
      %p75 = scmp.eq.s32.totalorder %s27, 1
      %p76 = por %p74, %p75
      %p78 = scmp.ne.s32.totalorder %s61, %s77
      %p79 = scmp.eq.s32.totalorder %s27, 0
      %p80 = por %p78, %p79
      %s82 = sadd.s32 %s81, 1
      %p85 = scmp.eq.s32.totalorder %s21, 1
      %p86 = scmp.ne.s32.totalorder %s81, %s83
      %p87 = scmp.eq.s32.totalorder %s21, 0
      %p88 = por %p86, %p87
      %p89 = scmp.ne.s32.totalorder %s81, %s83
      %p90 = scmp.eq.s32.totalorder %s26, 1
      %p91 = por %p89, %p90
      %p92 = scmp.ne.s32.totalorder %s83, %s84
      %p93 = scmp.eq.s32.totalorder %s26, 0
      %p94 = por %p92, %p93
      %p95 = scmp.ne.s32.totalorder %s83, %s84
      %p96 = scmp.eq.s32.totalorder %s27, 1
      %p97 = por %p95, %p96
      %p99 = scmp.ne.s32.totalorder %s84, %s98
      %p100 = scmp.eq.s32.totalorder %s27, 0
      %p101 = por %p99, %p100
      %s103 = sadd.s32 %s102, 1
      %p106 = scmp.eq.s32.totalorder %s21, 1
      %p107 = scmp.ne.s32.totalorder %s102, %s104
      %p108 = scmp.eq.s32.totalorder %s21, 0
      %p109 = por %p107, %p108
      %p110 = scmp.ne.s32.totalorder %s102, %s104
      %p111 = scmp.eq.s32.totalorder %s26, 1
      %p112 = por %p110, %p111
      %p113 = scmp.ne.s32.totalorder %s104, %s105
      %p114 = scmp.eq.s32.totalorder %s26, 0
      %p115 = por %p113, %p114
      %p116 = scmp.ne.s32.totalorder %s104, %s105
      %p117 = scmp.eq.s32.totalorder %s27, 1
      %p118 = por %p116, %p117
      %p120 = scmp.ne.s32.totalorder %s105, %s119
      %p121 = scmp.eq.s32.totalorder %s27, 0
      %p122 = por %p120, %p121
      %s124 = sadd.s32 %s123, 1
      %p127 = scmp.eq.s32.totalorder %s21, 1
      %p128 = scmp.ne.s32.totalorder %s123, %s125
      %p129 = scmp.eq.s32.totalorder %s21, 0
      %p130 = por %p128, %p129
      %p131 = scmp.ne.s32.totalorder %s123, %s125
      %p132 = scmp.eq.s32.totalorder %s26, 1
      %p133 = por %p131, %p132
      %p134 = scmp.ne.s32.totalorder %s125, %s126
      %p135 = scmp.eq.s32.totalorder %s26, 0
      %p136 = por %p134, %p135
      %p137 = scmp.ne.s32.totalorder %s125, %s126
      %p138 = scmp.eq.s32.totalorder %s27, 1
      %p139 = por %p137, %p138
      %p141 = scmp.ne.s32.totalorder %s126, %s140
      %p142 = scmp.eq.s32.totalorder %s27, 0
      %p143 = por %p141, %p142
      %s145 = sadd.s32 %s144, 1
      %p148 = scmp.eq.s32.totalorder %s21, 1
      %p149 = scmp.ne.s32.totalorder %s144, %s146
      %p150 = scmp.eq.s32.totalorder %s21, 0
      %p151 = por %p149, %p150
      %p152 = scmp.ne.s32.totalorder %s144, %s146
      %p153 = scmp.eq.s32.totalorder %s26, 1
      %p154 = por %p152, %p153
      %p155 = scmp.ne.s32.totalorder %s146, %s147
      %p156 = scmp.eq.s32.totalorder %s26, 0
      %p157 = por %p155, %p156
      %p158 = scmp.ne.s32.totalorder %s146, %s147
      %p159 = scmp.eq.s32.totalorder %s27, 1
      %p160 = por %p158, %p159
      %p162 = scmp.ne.s32.totalorder %s147, %s161
      %p163 = scmp.eq.s32.totalorder %s27, 0
      %p164 = por %p162, %p163
      %s166 = sadd.s32 %s165, 1
      %p169 = scmp.eq.s32.totalorder %s21, 1
      %p170 = scmp.ne.s32.totalorder %s165, %s167
      %p171 = scmp.eq.s32.totalorder %s21, 0
      %p172 = por %p170, %p171
      %p173 = scmp.ne.s32.totalorder %s165, %s167
      %p174 = scmp.eq.s32.totalorder %s26, 1
      %p175 = por %p173, %p174
      %p176 = scmp.ne.s32.totalorder %s167, %s168
      %p177 = scmp.eq.s32.totalorder %s26, 0
      %p178 = por %p176, %p177
      %p179 = scmp.ne.s32.totalorder %s167, %s168
      %p180 = scmp.eq.s32.totalorder %s27, 1
      %p181 = por %p179, %p180
      %p183 = scmp.ne.s32.totalorder %s168, %s182
      %p184 = scmp.eq.s32.totalorder %s27, 0
      %p185 = por %p183, %p184
      %s187 = sadd.s32 %s186, 1
      %p190 = scmp.eq.s32.totalorder %s21, 1
      %p191 = scmp.ne.s32.totalorder %s186, %s188
      %p192 = scmp.eq.s32.totalorder %s21, 0
      %p193 = por %p191, %p192
      %p194 = scmp.ne.s32.totalorder %s186, %s188
      %p195 = scmp.eq.s32.totalorder %s26, 1
      %p196 = por %p194, %p195
      %p197 = scmp.ne.s32.totalorder %s188, %s189
      %p198 = scmp.eq.s32.totalorder %s26, 0
      %p199 = por %p197, %p198
      %p200 = scmp.ne.s32.totalorder %s188, %s189
      %p201 = scmp.eq.s32.totalorder %s27, 1
      %p202 = por %p200, %p201
      %p204 = scmp.ne.s32.totalorder %s189, %s203
      %p205 = scmp.eq.s32.totalorder %s27, 0
      %p206 = por %p204, %p205
      %s208 = sadd.s32 %s207, 1
      %p211 = scmp.eq.s32.totalorder %s21, 1
      %p212 = scmp.ne.s32.totalorder %s207, %s209
      %p213 = scmp.eq.s32.totalorder %s21, 0
      %p214 = por %p212, %p213
      %p215 = scmp.ne.s32.totalorder %s207, %s209
      %p216 = scmp.eq.s32.totalorder %s26, 1
      %p217 = por %p215, %p216
      %p218 = scmp.ne.s32.totalorder %s209, %s210
      %p219 = scmp.eq.s32.totalorder %s26, 0
      %p220 = por %p218, %p219
      %p221 = scmp.ne.s32.totalorder %s209, %s210
      %p222 = scmp.eq.s32.totalorder %s27, 1
      %p223 = por %p221, %p222
      %p225 = scmp.ne.s32.totalorder %s210, %s224
      %p226 = scmp.eq.s32.totalorder %s27, 0
      %p227 = por %p225, %p226
      %s228 = ssub.s32 %s21, %s28
      %p229 = scmp.eq.s32.totalorder %s228, 0
      %s231 = sadd.s32 %s230, 1
      %s232 = scalar_select %p229, %s230, %s231
      %p235 = pneg %p229
      %p236 = scmp.eq.s32.totalorder %s21, 1
      %p237 = por %p235, %p236
      %p238 = scmp.ne.s32.totalorder %s230, %s233
      %p239 = scmp.eq.s32.totalorder %s21, 0
      %p240 = por %p238, %p239
      %p241 = scmp.ne.s32.totalorder %s230, %s233
      %p242 = scmp.eq.s32.totalorder %s26, 1
      %p243 = por %p241, %p242
      %p244 = scmp.ne.s32.totalorder %s233, %s234
      %p245 = scmp.eq.s32.totalorder %s26, 0
      %p246 = por %p244, %p245
      %p247 = scmp.ne.s32.totalorder %s233, %s234
      %p248 = scmp.eq.s32.totalorder %s27, 1
      %p249 = por %p247, %p248
      %p251 = scmp.ne.s32.totalorder %s234, %s250
      %p252 = scmp.eq.s32.totalorder %s27, 0
      %p253 = por %p251, %p252
      %p254 = scmp.le.s32.totalorder 1, %s21
      %p255 = scmp.lt.s32.totalorder %s21, 3
      %p256 = pnand %p254, %p255
      %p257 = pneg %p256
      // Predicated region
      $region9: #{tpu_custom_call.1} parent=5 // pred_check
        _
      $region10: #{tpu_custom_call.1} parent=5 // pred_check_branch
        %259 = sbr.rel (%p256) target = $region12
      $region11: #{tpu_custom_call.1} parent=5 // pred_region
        %s260 = ssub.s32 %s21, 1
        // Predicated region
        $region13: #{tpu_custom_call.1} parent=11 // pred_check
          %p261 = pneg %p94
        $region14: #{tpu_custom_call.1} parent=11 // pred_check_branch
          %263 = sbr.rel (%p261) target = $region16
        $region15: #{tpu_custom_call.1} parent=11 // pred_region
          %265 = vsyncadd [#allocation5], 0
          %s266 = sshll.u32 %s2, 4
          %s267 = int_to_ptr.hbm [resolvable:$true] %s266
          %s268 = sshll.u32 [#allocation6], 4
          %s269 = int_to_ptr.vmem [resolvable:$true] %s268
          %274 = dma.hbm_to_vmem [thread:$0]  %s267, 512, %s269, [#allocation5], 256, 256, 16
        $region16: #{tpu_custom_call.1} parent=11 // pred_fallthru
          _
        // Predicated region
        $region17: #{tpu_custom_call.1} parent=11 // pred_check
          %p275 = pneg %p115
        $region18: #{tpu_custom_call.1} parent=11 // pred_check_branch
          %277 = sbr.rel (%p275) target = $region20
        $region19: #{tpu_custom_call.1} parent=11 // pred_region
          _
        $region20: #{tpu_custom_call.1} parent=11 // pred_fallthru
          _
        // Predicated region
        $region21: #{tpu_custom_call.1} parent=11 // pred_check
          %p278 = pneg %p136
        $region22: #{tpu_custom_call.1} parent=11 // pred_check_branch
          %280 = sbr.rel (%p278) target = $region24
        $region23: #{tpu_custom_call.1} parent=11 // pred_region
          _
        $region24: #{tpu_custom_call.1} parent=11 // pred_fallthru
          _
        // Predicated region
        $region25: #{tpu_custom_call.1} parent=11 // pred_check
          %p281 = pneg %p157
        $region26: #{tpu_custom_call.1} parent=11 // pred_check_branch
          %283 = sbr.rel (%p281) target = $region28
        $region27: #{tpu_custom_call.1} parent=11 // pred_region
          _
        $region28: #{tpu_custom_call.1} parent=11 // pred_fallthru
          _
        // Predicated region
        $region29: #{tpu_custom_call.1} parent=11 // pred_check
          %p284 = pneg %p178
        $region30: #{tpu_custom_call.1} parent=11 // pred_check_branch
          %286 = sbr.rel (%p284) target = $region32
        $region31: #{tpu_custom_call.1} parent=11 // pred_region
          _
        $region32: #{tpu_custom_call.1} parent=11 // pred_fallthru
          _
        // Predicated region
        $region33: #{tpu_custom_call.1} parent=11 // pred_check
          %p287 = pneg %p199
        $region34: #{tpu_custom_call.1} parent=11 // pred_check_branch
          %289 = sbr.rel (%p287) target = $region36
        $region35: #{tpu_custom_call.1} parent=11 // pred_region
          _
        $region36: #{tpu_custom_call.1} parent=11 // pred_fallthru
          _
        // Predicated region
        $region37: #{tpu_custom_call.1} parent=11 // pred_check
          %p290 = pneg %p220
        $region38: #{tpu_custom_call.1} parent=11 // pred_check_branch
          %292 = sbr.rel (%p290) target = $region40
        $region39: #{tpu_custom_call.1} parent=11 // pred_region
          _
        $region40: #{tpu_custom_call.1} parent=11 // pred_fallthru
          _
      $region12: #{tpu_custom_call.1} parent=5 // pred_fallthru
        _
      %p293 = scmp.lt.s32.totalorder %s21, 2
      // Predicated region
      $region41: #{tpu_custom_call.1} parent=5 // pred_check
        %p294 = pneg %p293
      $region42: #{tpu_custom_call.1} parent=5 // pred_check_branch
        %296 = sbr.rel (%p294) target = $region44
      $region43: #{tpu_custom_call.1} parent=5 // pred_region
        // Predicated region
        $region45: #{tpu_custom_call.1} parent=43 // pred_check
          %p297 = pneg %p41
        $region46: #{tpu_custom_call.1} parent=43 // pred_check_branch
          %299 = sbr.rel (%p297) target = $region48
        $region47: #{tpu_custom_call.1} parent=43 // pred_region
          %s300 = sand.u32 %s31, 1
          %s301 = scalar_lea.sflag [#allocation3], %s300
          %s302 = sand.u32 %s31, 1
          %s303 = smul.addr %s302, 8
          %s304 = scalar_lea.vmem [#allocation2], %s303
          %306 = vsyncadd %s301, 0
          %s307 = smul.addr %s21, 2
          %s308 = smul.addr %s307, 4
          %s309 = scalar_lea.hbm %s0, %s308
          %s311 = sshll.u32 %s309, 4
          %s312 = int_to_ptr.hbm [resolvable:$true] %s311
          %s313 = sshll.u32 %s304, 4
          %s314 = int_to_ptr.vmem [resolvable:$true] %s313
          %316 = dma.hbm_to_vmem [thread:$0]  %s312, 128, %s314, %s301
        $region48: #{tpu_custom_call.1} parent=43 // pred_fallthru
          _
        // Predicated region
        $region49: #{tpu_custom_call.1} parent=43 // pred_check
          %p317 = pneg %p67
        $region50: #{tpu_custom_call.1} parent=43 // pred_check_branch
          %319 = sbr.rel (%p317) target = $region52
        $region51: #{tpu_custom_call.1} parent=43 // pred_region
          %s320 = sand.u32 %s21, 1
          %s321 = scalar_lea.sflag [#allocation5], %s320
          %s322 = sand.u32 %s57, 1
          %s323 = smul.addr %s322, 8
          %s324 = scalar_lea.vmem [#allocation4], %s323
          %326 = vsyncadd %s321, 0
          %s327 = smul.addr %s21, 2
          %s328 = smul.addr %s327, 4
          %s329 = scalar_lea.hbm %s1, %s328
          %s331 = sshll.u32 %s329, 4
          %s332 = int_to_ptr.hbm [resolvable:$true] %s331
          %s333 = sshll.u32 %s324, 4
          %s334 = int_to_ptr.vmem [resolvable:$true] %s333
          %336 = dma.hbm_to_vmem [thread:$0]  %s332, 128, %s334, %s321
        $region52: #{tpu_custom_call.1} parent=43 // pred_fallthru
          _
      $region44: #{tpu_custom_call.1} parent=5 // pred_fallthru
        _
      %p337 = scmp.le.s32.totalorder 1, %s21
      %p338 = scmp.lt.s32.totalorder %s21, 3
      %p339 = pnand %p337, %p338
      %p340 = pneg %p339
      // Predicated region
      $region53: #{tpu_custom_call.1} parent=5 // pred_check
        _
      $region54: #{tpu_custom_call.1} parent=5 // pred_check_branch
        %342 = sbr.rel (%p339) target = $region56
      $region55: #{tpu_custom_call.1} parent=5 // pred_region
        %s343 = ssub.s32 %s21, 1
        %s344 = sand.u32 %s34, 1
        %s345 = scalar_lea.sflag [#allocation3], %s344
        %s346 = sand.u32 %s34, 1
        %s347 = smul.addr %s346, 8
        %s348 = scalar_lea.vmem [#allocation2], %s347
        // Predicated region
        $region57: #{tpu_custom_call.1} parent=55 // pred_check
          %p349 = pneg %p47
        $region58: #{tpu_custom_call.1} parent=55 // pred_check_branch
          %351 = sbr.rel (%p349) target = $region60
        $region59: #{tpu_custom_call.1} parent=55 // pred_region
          %353 = dma.done %s345, 128
        $region60: #{tpu_custom_call.1} parent=55 // pred_fallthru
          _
        %s354 = sand.u32 %s26, 1
        %s355 = scalar_lea.sflag [#allocation5], %s354
        %s356 = sand.u32 %s60, 1
        %s357 = smul.addr %s356, 8
        %s358 = scalar_lea.vmem [#allocation4], %s357
        // Predicated region
        $region61: #{tpu_custom_call.1} parent=55 // pred_check
          %p359 = pneg %p73
        $region62: #{tpu_custom_call.1} parent=55 // pred_check_branch
          %361 = sbr.rel (%p359) target = $region64
        $region63: #{tpu_custom_call.1} parent=55 // pred_region
          %363 = dma.done %s355, 128
        $region64: #{tpu_custom_call.1} parent=55 // pred_fallthru
          _
        // Predicated region
        $region65: #{tpu_custom_call.1} parent=55 // pred_check
          %p364 = pneg %p94
        $region66: #{tpu_custom_call.1} parent=55 // pred_check_branch
          %366 = sbr.rel (%p364) target = $region68
        $region67: #{tpu_custom_call.1} parent=55 // pred_region
          %368 = dma.done [#allocation5], 512
        $region68: #{tpu_custom_call.1} parent=55 // pred_fallthru
          _
        %s369 = sand.u32 %s34, 1
        %s370 = scalar_lea.sflag [#allocation3], %s369
        %s371 = sand.u32 %s34, 1
        %s372 = smul.addr %s371, 8
        %s373 = scalar_lea.vmem [#allocation2], %s372
        %p374 = pneg %p47
        %p375 = pneg %p44
        %s376 = sand.u32 %s26, 1
        %s377 = scalar_lea.sflag [#allocation5], %s376
        %s378 = sand.u32 %s60, 1
        %s379 = smul.addr %s378, 8
        %s380 = scalar_lea.vmem [#allocation4], %s379
        %p381 = pneg %p73
        %p382 = pneg %p70
        %p383 = pneg %p94
        %p384 = pneg %p91
        %p385 = pneg %p115
        %p386 = pneg %p112
        %p387 = pneg %p136
        %p388 = pneg %p133
        %p389 = pneg %p157
        %p390 = pneg %p154
        %p391 = pneg %p178
        %p392 = pneg %p175
        %p393 = pneg %p199
        %p394 = pneg %p196
        %p395 = pneg %p220
        %p396 = pneg %p217
        %p397 = pneg %p246
        %p398 = pneg %p243
        %p399 = scmp.lt.s32.totalorder %s26, 1
        %s400 = scalar_select %p399, %s26, 1
        %s401 = smul.addr %s400, 2
        %s402 = smul.addr %s401, 4
        %s403 = scalar_lea.vmem %s9, %s402
        %p404 = scmp.lt.s32.totalorder %s26, 1
        %s405 = scalar_select %p404, %s26, 1
        %s406 = smul.addr %s405, 2
        %s407 = smul.addr %s406, 4
        %s408 = scalar_lea.vmem %s9, %s407
        %v410 = vld [vmem:[%s358] sm:$0xff]
        %v411 = vld [vmem:[%s348] sm:$0xff]
        %413 = vst [vmem:[#allocation1] ss:$2 sm:$0xff] %v410
        %v414 = vld.sshfl [vmem:[#allocation1] sm:$0xff pattern:$0x75316420]
        %v415 = vld.sshfl [vmem:[#allocation1 + $0x8] sm:$0xff pattern:$0x75316420]
        %s419 = scalar_lea.vmem [#allocation1], 1
        %420 = vst [vmem:[%s419] ss:$2 sm:$0xff] %v411
        %v421 = vld.sshfl [vmem:[#allocation1] sm:$0xff pattern:$0x75316420]
        %v422 = vld.sshfl [vmem:[#allocation1 + $0x8] sm:$0xff pattern:$0x75316420]
        %vm425 = vcmask 1043456
        %v426 = vsel %vm425, %v414, %v421
        %v427 = vsel %vm425, %v415, %v422
        %430 = vrot.lane.b32.xlu0 %v426, 17
        %v431 = vpop.permute.xlu0 %430
        %432 = vrot.lane.b32.xlu0 %v427, 17
        %v433 = vpop.permute.xlu0 %432
        %vm434 = vcmask 138240
        %v435 = vsel %vm434, %v431, %v433
        %v438 = vsel %vm434, 0.0, %v431
        %v439 = vld [vmem:[#allocation6] ss:$8 sm:$0x3]
        %v441 = vperm.slane %v439, 0
        %v442 = vperm.slane %v439, 1
        %v445 = vmul.f32 %v438, %v441
        %v446 = vmul.f32 %v435, %v442
        %447 = vrot.lane.b32.xlu0 %v426, 16
        %v448 = vpop.permute.xlu0 %447
        %449 = vrot.lane.b32.xlu0 %v427, 16
        %v450 = vpop.permute.xlu0 %449
        %vm451 = vcmask 130048
        %v452 = vsel %vm451, %v448, %v450
        %v455 = vsel %vm451, 0.0, %v448
        %s456 = scalar_lea.vmem [#allocation6], 1
        %v457 = vld [vmem:[%s456] ss:$8 sm:$0x3]
        %v459 = vperm.slane %v457, 0
        %v460 = vperm.slane %v457, 1
        %v463 = vmul.f32 %v455, %v459
        %v464 = vmul.f32 %v452, %v460
        %465 = vrot.lane.b32.xlu0 %v426, 15
        %v466 = vpop.permute.xlu0 %465
        %467 = vrot.lane.b32.xlu0 %v427, 15
        %v468 = vpop.permute.xlu0 %467
        %vm469 = vcmask 121856
        %v470 = vsel %vm469, %v466, %v468
        %v473 = vsel %vm469, 0.0, %v466
        %s474 = scalar_lea.vmem [#allocation6], 2
        %v475 = vld [vmem:[%s474] ss:$8 sm:$0x3]
        %v477 = vperm.slane %v475, 0
        %v478 = vperm.slane %v475, 1
        %v481 = vmul.f32 %v473, %v477
        %v482 = vmul.f32 %v470, %v478
        %483 = vrot.lane.b32.xlu0 %v426, 1
        %v484 = vpop.permute.xlu0 %483
        %485 = vrot.lane.b32.xlu0 %v427, 1
        %v486 = vpop.permute.xlu0 %485
        %vm487 = vcmask 7168
        %v488 = vsel %vm487, %v484, %v486
        %v491 = vsel %vm487, 0.0, %v484
        %s492 = scalar_lea.vmem [#allocation6], 3
        %v493 = vld [vmem:[%s492] ss:$8 sm:$0x3]
        %v495 = vperm.slane %v493, 0
        %v496 = vperm.slane %v493, 1
        %v499 = vmul.f32 %v491, %v495
        %v500 = vmul.f32 %v488, %v496
        %s501 = scalar_lea.vmem [#allocation6], 4
        %v502 = vld [vmem:[%s501] ss:$8 sm:$0x3]
        %v504 = vperm.slane %v502, 0
        %v505 = vperm.slane %v502, 1
        %v508 = vmul.f32 %v426, %v504
        %v509 = vmul.f32 %v427, %v505
        %510 = vrot.lane.b32.xlu0 %v426, 127
        %v511 = vpop.permute.xlu0 %510
        %512 = vrot.lane.b32.xlu0 %v427, 127
        %v513 = vpop.permute.xlu0 %512
        %vm514 = vcmask 1039360
        %v515 = vsel %vm514, %v511, %v513
        %v518 = vsel %vm514, %v513, 0.0
        %s519 = scalar_lea.vmem [#allocation6], 5
        %v520 = vld [vmem:[%s519] ss:$8 sm:$0x3]
        %v522 = vperm.slane %v520, 0
        %v523 = vperm.slane %v520, 1
        %v526 = vmul.f32 %v515, %v522
        %v527 = vmul.f32 %v518, %v523
        %528 = vrot.lane.b32.xlu0 %v426, 113
        %v529 = vpop.permute.xlu0 %528
        %530 = vrot.lane.b32.xlu0 %v427, 113
        %v531 = vpop.permute.xlu0 %530
        %vm532 = vcmask 924672
        %v533 = vsel %vm532, %v529, %v531
        %v536 = vsel %vm532, %v531, 0.0
        %s537 = scalar_lea.vmem [#allocation6], 6
        %v538 = vld [vmem:[%s537] ss:$8 sm:$0x3]
        %v540 = vperm.slane %v538, 0
        %v541 = vperm.slane %v538, 1
        %v544 = vmul.f32 %v533, %v540
        %v545 = vmul.f32 %v536, %v541
        %546 = vrot.lane.b32.xlu0 %v426, 112
        %v547 = vpop.permute.xlu0 %546
        %548 = vrot.lane.b32.xlu0 %v427, 112
        %v549 = vpop.permute.xlu0 %548
        %vm550 = vcmask 916480
        %v551 = vsel %vm550, %v547, %v549
        %v554 = vsel %vm550, %v549, 0.0
        %s555 = scalar_lea.vmem [#allocation6], 7
        %v556 = vld [vmem:[%s555] ss:$8 sm:$0x3]
        %v558 = vperm.slane %v556, 0
        %v559 = vperm.slane %v556, 1
        %v562 = vmul.f32 %v551, %v558
        %v563 = vmul.f32 %v554, %v559
        %564 = vrot.lane.b32.xlu0 %v426, 111
        %v565 = vpop.permute.xlu0 %564
        %566 = vrot.lane.b32.xlu0 %v427, 111
        %v567 = vpop.permute.xlu0 %566
        %vm568 = vcmask 908288
        %v569 = vsel %vm568, %v565, %v567
        %v572 = vsel %vm568, %v567, 0.0
        %s573 = scalar_lea.vmem [#allocation6], 16
        %v574 = vld [vmem:[%s573] ss:$8 sm:$0x3]
        %v576 = vperm.slane %v574, 0
        %v577 = vperm.slane %v574, 1
        %v580 = vmul.f32 %v569, %v576
        %v581 = vmul.f32 %v572, %v577
        %v582 = vpack.c.bf16 %v463, %v445
        %v583 = vpack.c.bf16 %v464, %v446
        %v584 = vpack.c.bf16 %v499, %v481
        %v585 = vpack.c.bf16 %v500, %v482
        %v586 = vpack.c.bf16 %v526, %v508
        %v587 = vpack.c.bf16 %v527, %v509
        %v588 = vpack.c.bf16 %v562, %v544
        %v589 = vpack.c.bf16 %v563, %v545
        %v590 = vpack.c.bf16 %v580, %v580
        %v591 = vpack.c.bf16 %v581, %v581
        %v592 = vld [vmem:[%s3] sm:$0x3]
        %v593 = vld [vmem:[%s4] sm:$0xf]
        %595 = vset.pattern.permute.xlu0 0
        %596 = vperm.xlu0 %595, %v593
        %v597 = vpop.permute.xlu0 %596
        %vm599 = vcmask 588800
        %v601 = vsel %vm599, %v592, 0
        %v604 = vsel %vm425, %v590, 0
        %v607 = vsel %vm425, %v591, 0
        %609 = vmatpush.bf16.msra.mxu0 0
        %610 = vmatpush.bf16.msra.mxu0 0
        %611 = vmatpush.bf16.msra.mxu0 0
        %612 = vmatpush.bf16.msra.mxu0 %v604
        %613 = vmatpush.bf16.msra.mxu0 %v588
        %614 = vmatpush.bf16.msra.mxu0 %v586
        %615 = vmatpush.bf16.msra.mxu0 %v584
        %616 = vmatpush.bf16.msra.mxu0 %v582
        %617 = vmatmul.bf16.gmra.mxu0 %v601
        %v618 = vpop.f32.mrf.mxu0
        %v619 = vadd.f32 %v597, %v618
        %v620 = vpop.f32.mrf.mxu0
        %621 = vdwg.mxu0
        %622 = vmatpush.bf16.msra.mxu0 0
        %623 = vmatpush.bf16.msra.mxu0 0
        %624 = vmatpush.bf16.msra.mxu0 0
        %625 = vmatpush.bf16.msra.mxu0 %v607
        %626 = vmatpush.bf16.msra.mxu0 %v589
        %627 = vmatpush.bf16.msra.mxu0 %v587
        %628 = vmatpush.bf16.msra.mxu0 %v585
        %629 = vmatpush.bf16.msra.mxu0 %v583
        %630 = vmatmul.bf16.gmra.mxu0 %v601
        %v631 = vpop.f32.mrf.mxu0
        %v632 = vadd.f32 %v597, %v631
        %v633 = vpop.f32.mrf.mxu0
        %634 = vdwg.mxu0
        %v635 = vmax.f32 %v619, 0.0
        %v636 = vmax.f32 %v632, 0.0
        %639 = vrot.lane.b32.xlu0 %v635, 17
        %v640 = vpop.permute.xlu0 %639
        %641 = vrot.lane.b32.xlu0 %v636, 17
        %v642 = vpop.permute.xlu0 %641
        %v643 = vsel %vm434, %v640, %v642
        %v646 = vsel %vm434, 0.0, %v640
        %v647 = vmul.f32 %v646, %v441
        %v648 = vmul.f32 %v643, %v442
        %649 = vrot.lane.b32.xlu0 %v635, 16
        %v650 = vpop.permute.xlu0 %649
        %651 = vrot.lane.b32.xlu0 %v636, 16
        %v652 = vpop.permute.xlu0 %651
        %v653 = vsel %vm451, %v650, %v652
        %v656 = vsel %vm451, 0.0, %v650
        %v657 = vmul.f32 %v656, %v459
        %v658 = vmul.f32 %v653, %v460
        %659 = vrot.lane.b32.xlu0 %v635, 15
        %v660 = vpop.permute.xlu0 %659
        %661 = vrot.lane.b32.xlu0 %v636, 15
        %v662 = vpop.permute.xlu0 %661
        %v663 = vsel %vm469, %v660, %v662
        %v666 = vsel %vm469, 0.0, %v660
        %v667 = vmul.f32 %v666, %v477
        %v668 = vmul.f32 %v663, %v478
        %669 = vrot.lane.b32.xlu0 %v635, 1
        %v670 = vpop.permute.xlu0 %669
        %671 = vrot.lane.b32.xlu0 %v636, 1
        %v672 = vpop.permute.xlu0 %671
        %v673 = vsel %vm487, %v670, %v672
        %v676 = vsel %vm487, 0.0, %v670
        %v677 = vmul.f32 %v676, %v495
        %v678 = vmul.f32 %v673, %v496
        %v679 = vmul.f32 %v635, %v504
        %v680 = vmul.f32 %v636, %v505
        %681 = vrot.lane.b32.xlu0 %v635, 127
        %v682 = vpop.permute.xlu0 %681
        %683 = vrot.lane.b32.xlu0 %v636, 127
        %v684 = vpop.permute.xlu0 %683
        %v685 = vsel %vm514, %v682, %v684
        %v688 = vsel %vm514, %v684, 0.0
        %v689 = vmul.f32 %v685, %v522
        %v690 = vmul.f32 %v688, %v523
        %691 = vrot.lane.b32.xlu0 %v635, 113
        %v692 = vpop.permute.xlu0 %691
        %693 = vrot.lane.b32.xlu0 %v636, 113
        %v694 = vpop.permute.xlu0 %693
        %v695 = vsel %vm532, %v692, %v694
        %v698 = vsel %vm532, %v694, 0.0
        %v699 = vmul.f32 %v695, %v540
        %v700 = vmul.f32 %v698, %v541
        %701 = vrot.lane.b32.xlu0 %v635, 112
        %v702 = vpop.permute.xlu0 %701
        %703 = vrot.lane.b32.xlu0 %v636, 112
        %v704 = vpop.permute.xlu0 %703
        %v705 = vsel %vm550, %v702, %v704
        %v708 = vsel %vm550, %v704, 0.0
        %v709 = vmul.f32 %v705, %v558
        %v710 = vmul.f32 %v708, %v559
        %711 = vrot.lane.b32.xlu0 %v635, 111
        %v712 = vpop.permute.xlu0 %711
        %713 = vrot.lane.b32.xlu0 %v636, 111
        %v714 = vpop.permute.xlu0 %713
        %v715 = vsel %vm568, %v712, %v714
        %v718 = vsel %vm568, %v714, 0.0
        %v719 = vmul.f32 %v715, %v576
        %v720 = vmul.f32 %v718, %v577
        %v723 = vrot.slane %v657, 4
        %v724 = vrot.slane %v658, 4
        %v729 = vrot.slane %v677, 4
        %v730 = vrot.slane %v678, 4
        %v735 = vrot.slane %v689, 4
        %v736 = vrot.slane %v690, 4
        %v741 = vrot.slane %v709, 4
        %v742 = vrot.slane %v710, 4
        %v745 = vsel %vm425, %v647, %v723
        %v746 = vsel %vm425, %v648, %v724
        %v747 = vsel %vm425, %v667, %v729
        %v748 = vsel %vm425, %v668, %v730
        %v749 = vsel %vm425, %v679, %v735
        %v750 = vsel %vm425, %v680, %v736
        %v751 = vsel %vm425, %v699, %v741
        %v752 = vsel %vm425, %v700, %v742
        %v753 = vpack.c.bf16 %v747, %v745
        %v754 = vpack.c.bf16 %v748, %v746
        %v755 = vpack.c.bf16 %v751, %v749
        %v756 = vpack.c.bf16 %v752, %v750
        %v757 = vpack.c.bf16 %v719, %v719
        %v758 = vpack.c.bf16 %v720, %v720
        %v759 = vld [vmem:[%s5] sm:$0x3]
        %v760 = vld [vmem:[%s6] sm:$0xf]
        %762 = vset.pattern.permute.xlu0 0
        %763 = vperm.xlu0 %762, %v760
        %v764 = vpop.permute.xlu0 %763
        %vm766 = vcmask 293888
        %v768 = vsel %vm766, %v759, 0
        %vm770 = vcmask 1041408
        %v772 = vsel %vm770, %v757, 0
        %v775 = vsel %vm770, %v758, 0
        %777 = vmatpush.bf16.msra.mxu0 0
        %778 = vmatpush.bf16.msra.mxu0 0
        %779 = vmatpush.bf16.msra.mxu0 0
        %780 = vmatpush.bf16.msra.mxu0 0
        %781 = vmatpush.bf16.msra.mxu0 0
        %782 = vmatpush.bf16.msra.mxu0 %v772
        %783 = vmatpush.bf16.msra.mxu0 %v755
        %784 = vmatpush.bf16.msra.mxu0 %v753
        %785 = vmatmul.bf16.gmra.mxu0 %v768
        %v786 = vpop.f32.mrf.mxu0
        %v787 = vadd.f32 %v764, %v786
        %v788 = vpop.f32.mrf.mxu0
        %789 = vdwg.mxu0
        %790 = vmatpush.bf16.msra.mxu0 0
        %791 = vmatpush.bf16.msra.mxu0 0
        %792 = vmatpush.bf16.msra.mxu0 0
        %793 = vmatpush.bf16.msra.mxu0 0
        %794 = vmatpush.bf16.msra.mxu0 0
        %795 = vmatpush.bf16.msra.mxu0 %v775
        %796 = vmatpush.bf16.msra.mxu0 %v756
        %797 = vmatpush.bf16.msra.mxu0 %v754
        %798 = vmatmul.bf16.gmra.mxu0 %v768
        %v799 = vpop.f32.mrf.mxu0
        %v800 = vadd.f32 %v764, %v799
        %v801 = vpop.f32.mrf.mxu0
        %802 = vdwg.mxu0
        %v803 = vmax.f32 %v787, 0.0
        %v804 = vmax.f32 %v800, 0.0
        %v805 = vld [vmem:[%s7] sm:$0x3]
        %v806 = vpack.c.bf16 %v803, %v803
        %v807 = vpack.c.bf16 %v804, %v804
        %v808 = vld [vmem:[%s8] sm:$0x7]
        %810 = vset.pattern.permute.xlu0 0
        %811 = vperm.xlu0 %810, %v808
        %v812 = vpop.permute.xlu0 %811
        %vm814 = vcmask 31744
        %v816 = vsel %vm814, %v805, 0
        %v819 = vsel %vm770, %v806, 0
        %v822 = vsel %vm770, %v807, 0
        %824 = vmatpush.bf16.msra.mxu0 0
        %825 = vmatpush.bf16.msra.mxu0 0
        %826 = vmatpush.bf16.msra.mxu0 0
        %827 = vmatpush.bf16.msra.mxu0 0
        %828 = vmatpush.bf16.msra.mxu0 0
        %829 = vmatpush.bf16.msra.mxu0 0
        %830 = vmatpush.bf16.msra.mxu0 0
        %831 = vmatpush.bf16.msra.mxu0 %v819
        %832 = vmatmul.bf16.gmra.mxu0 %v816
        %v833 = vpop.f32.mrf.mxu0
        %v834 = vadd.f32 %v812, %v833
        %v835 = vpop.f32.mrf.mxu0
        %836 = vdwg.mxu0
        %837 = vmatpush.bf16.msra.mxu0 0
        %838 = vmatpush.bf16.msra.mxu0 0
        %839 = vmatpush.bf16.msra.mxu0 0
        %840 = vmatpush.bf16.msra.mxu0 0
        %841 = vmatpush.bf16.msra.mxu0 0
        %842 = vmatpush.bf16.msra.mxu0 0
        %843 = vmatpush.bf16.msra.mxu0 0
        %844 = vmatpush.bf16.msra.mxu0 %v822
        %845 = vmatmul.bf16.gmra.mxu0 %v816
        %v846 = vpop.f32.mrf.mxu0
        %v847 = vadd.f32 %v812, %v846
        %v848 = vpop.f32.mrf.mxu0
        %849 = vdwg.mxu0
        %v852 = vrot.slane %v847, 4
        %v853 = vsel %vm425, %v834, %v852
        %855 = vst [vmem:[%s408] sm:$0x77] %v853
        %p856 = scmp.lt.s32.totalorder %s26, 1
        %s857 = scalar_select %p856, %s26, 1
        %s858 = smul.addr %s857, 2
        %s859 = smul.addr %s858, 4
        %s860 = scalar_lea.vmem %s9, %s859
        // Predicated region
        $region69: #{tpu_custom_call.1} parent=55 // pred_check
          %p861 = pneg %p243
        $region70: #{tpu_custom_call.1} parent=55 // pred_check_branch
          %863 = sbr.rel (%p861) target = $region72
        $region71: #{tpu_custom_call.1} parent=55 // pred_region
          _
        $region72: #{tpu_custom_call.1} parent=55 // pred_fallthru
          _
      $region56: #{tpu_custom_call.1} parent=5 // pred_fallthru
        _
      %p864 = scmp.le.s32.totalorder 2, %s21
      // Predicated region
      $region73: #{tpu_custom_call.1} parent=5 // pred_check
        %p865 = pneg %p864
      $region74: #{tpu_custom_call.1} parent=5 // pred_check_branch
        %867 = sbr.rel (%p865) target = $region76
      $region75: #{tpu_custom_call.1} parent=5 // pred_region
        %s868 = ssub.s32 %s21, 2
        // Predicated region
        $region77: #{tpu_custom_call.1} parent=75 // pred_check
          %p869 = pneg %p249
        $region78: #{tpu_custom_call.1} parent=75 // pred_check_branch
          %871 = sbr.rel (%p869) target = $region80
        $region79: #{tpu_custom_call.1} parent=75 // pred_region
          %p872 = scmp.lt.s32.totalorder %s27, 1
          %s873 = scalar_select %p872, %s27, 1
          %s874 = smul.addr %s873, 2
          %s875 = smul.addr %s874, 4
          %s876 = scalar_lea.vmem %s9, %s875
        $region80: #{tpu_custom_call.1} parent=75 // pred_fallthru
          _
      $region76: #{tpu_custom_call.1} parent=5 // pred_fallthru
        _
    $region6: #{tpu_custom_call.1} parent=1 // loop_footer
      %s25 = sadd.s32 1, %s21
    $region7: #{tpu_custom_call.1} parent=1 // loop_footer_branch
      %20 = sbr.rel target = $region3
    $region8: #{tpu_custom_call.1} parent=1 // loop_exit
      _
    %877 = vsyncpa [#allocation3], 1
    %s878 = scalar_lea.sflag [#allocation3], 1
    %879 = vsyncpa %s878, 1
    %880 = vsyncpa [#allocation5], 1
    %s881 = scalar_lea.sflag [#allocation5], 1
    %882 = vsyncpa %s881, 1

</llo_original>
